<compile_context>
chip_gen: v7x
topology: tpu7x:2x2x1
jax: 0.10.0
libtpu: 0.0.40
codegen_flags: <defaults>
</compile_context>

<pallas_src>
import functools

import jax
import jax.numpy as jnp
from jax.experimental import pallas as pl
from jax.experimental.pallas import tpu as pltpu

_LANE = 128      # vreg lane width (last dim)
_SUBLANE = 8     # vreg sublane width (second-to-last dim)
_MAX_TB = 1024   # cap on rows per grid step (keeps spilled intermediates well under VMEM)


def _round_up(x, m):
    return ((x + m - 1) // m) * m


def _dual_tensorcore():
    """Best-effort detection of a 2-TensorCore chip (v7x); falls back to single-TC."""
    try:
        kind = jax.devices()[0].device_kind.lower()
    except Exception:
        return False
    return ("v7" in kind) or ("7x" in kind)


def _classifier_bbb_kernel(x_ref, w1_ref, b1_ref, w2_ref, b2_ref, w3_ref, b3_ref,
                           o_ref, *, in_dim, out_dim):
    """One batch tile: x [TB, in_dim] (unpadded) -> log-probs [TB, out_dim] (unpadded)."""
    x = x_ref[...]                                   # [TB, in_dim] f32
    w1 = w1_ref[...]                                 # [in_dim, HID_P] f32

    # ---- layer 1: linear + sigmoid ----
    # For tiny in_dim (the module implies in_dim=2) a K=2 MXU matmul wastes the MXU and
    # risks awkward small-contraction layouts; a couple of broadcast FMAs on the VPU are
    # cheaper and always lower. Larger in_dim uses the MXU.
    if in_dim <= 16:
        z1 = x[:, 0:1] * w1[0:1, :]
        for k in range(1, in_dim):
            z1 = z1 + x[:, k:k + 1] * w1[k:k + 1, :]
        z1 = z1 + b1_ref[...]
    else:
        z1 = jnp.dot(x, w1, preferred_element_type=jnp.float32) + b1_ref[...]
    h1 = pl.reciprocal(1.0 + jnp.exp(-z1))           # sigmoid; exp on EUP

    # ---- layer 2: linear + sigmoid (128x128 lane-dense MXU matmul) ----
    z2 = jnp.dot(h1, w2_ref[...], preferred_element_type=jnp.float32) + b2_ref[...]
    h2 = pl.reciprocal(1.0 + jnp.exp(-z2))

    # ---- output layer: linear + log_softmax over the *real* out_dim columns ----
    z3 = jnp.dot(h2, w3_ref[...], preferred_element_type=jnp.float32) + b3_ref[...]
    col = jax.lax.broadcasted_iota(jnp.int32, z3.shape, 1)
    z3 = jnp.where(col < out_dim, z3, jnp.float32(-1e30))   # keep padded logits out of LSE
    z_max = jnp.max(z3, axis=-1, keepdims=True)
    shifted = z3 - z_max
    lse = jnp.log(jnp.sum(jnp.exp(shifted), axis=-1, keepdims=True))
    logp = shifted - lse
    # Narrow (lane-masked) store: only the real out_dim columns go back to HBM.
    o_ref[...] = logp[:, :out_dim]


def classifier_bbb_forward(x, params):
    """x: [B, in_dim] f32. params: {'h1'|'h2'|'out': {'w': [out,in], 'b': [out]}} (PyTorch layout)."""
    w1, b1 = params["h1"]["w"], params["h1"]["b"]
    w2, b2 = params["h2"]["w"], params["h2"]["b"]
    w3, b3 = params["out"]["w"], params["out"]["b"]

    B, in_dim = x.shape
    hidden_dim = w1.shape[0]
    out_dim = w3.shape[0]

    hid_p = _round_up(hidden_dim, _LANE)
    out_p = _round_up(out_dim, _LANE)

    # --- batch tiling ---
    # v5e/v6e (single TC): one grid step when the batch fits (grid is a serial loop there).
    # v7x: two equal tiles so both TensorCores get the same amount of work.
    n_tiles_target = 2 if _dual_tensorcore() else 1
    rows_per_tile = -(-B // n_tiles_target)                      # ceil
    tb = min(_round_up(max(rows_per_tile, 1), _SUBLANE), _MAX_TB)
    b_pad = _round_up(B, tb)

    xf = x.astype(jnp.float32)
    if b_pad != B:
        xf = jnp.pad(xf, ((0, b_pad - B), (0, 0)))               # rows only; no lane padding

    def pad2(a, rows, cols):
        return jnp.pad(a.astype(jnp.float32),
                       ((0, rows - a.shape[0]), (0, cols - a.shape[1])))

    # Transpose to [in, out] once and zero-pad only the *output* feature axes to lane width.
    # (Zero weight rows/cols make the padding exact: padded hidden sigmoid(0)=0.5 units hit
    #  zero next-layer weights, and the log_softmax is masked to the real out_dim columns.)
    w1p = pad2(w1.T, in_dim, hid_p)      # [in_dim, hid_p] -- K axis NOT padded
    w2p = pad2(w2.T, hid_p, hid_p)
    w3p = pad2(w3.T, hid_p, out_p)
    b1p = pad2(b1.reshape(1, -1), 1, hid_p)
    b2p = pad2(b2.reshape(1, -1), 1, hid_p)
    b3p = pad2(b3.reshape(1, -1), 1, out_p)

    # Weights/biases: constant index_map -> VMEM-resident across the batch grid.
    def resident(a):
        return pl.BlockSpec(a.shape, lambda i: (0,) * a.ndim)

    out = pl.pallas_call(
        functools.partial(_classifier_bbb_kernel, in_dim=in_dim, out_dim=out_dim),
        out_shape=jax.ShapeDtypeStruct((b_pad, out_dim), jnp.float32),
        grid=(b_pad // tb,),
        in_specs=[
            pl.BlockSpec((tb, in_dim), lambda i: (i, 0)),         # activations stream, unpadded
            resident(w1p), resident(b1p),
            resident(w2p), resident(b2p),
            resident(w3p), resident(b3p),
        ],
        out_specs=pl.BlockSpec((tb, out_dim), lambda i: (i, 0)),  # narrow (masked) store
        compiler_params=pltpu.CompilerParams(
            dimension_semantics=("parallel",)),                   # shards across TCs on v7x
    )(xf, w1p, b1p, w2p, b2p, w3p, b3p)

    return out[:B]


# ---------------- Bayes-by-Backprop parameter handling (plain JAX, fused under jit) -------------

def _softplus(v):
    return jnp.log1p(jnp.exp(v))


def init_variational_params(key, in_dim, hidden_dim, out_dim):
    """Replicates Linear_BBB.__init__ variational parameters (mu uniform(-0.6,0.6), rho=-6)."""
    def layer(k, fin, fout):
        k_wmu, k_bmu = jax.random.split(k)
        return dict(
            w_mu=jax.random.uniform(k_wmu, (fout, fin), jnp.float32, -0.6, 0.6),
            w_rho=jnp.full((fout, fin), -6.0, jnp.float32),
            b_mu=jax.random.uniform(k_bmu, (fout,), jnp.float32, -0.6, 0.6),
            b_rho=jnp.full((fout,), -6.0, jnp.float32),
        )
    k1, k2, k3 = jax.random.split(key, 3)
    return dict(h1=layer(k1, in_dim, hidden_dim),
                h2=layer(k2, hidden_dim, hidden_dim),
                out=layer(k3, hidden_dim, out_dim))


def sample_params(key, vp):
    """Reparameterized weight sample: w = w_mu + softplus(w_rho) * eps (same for b)."""
    keys = jax.random.split(key, 3)
    out = {}
    for k, name in zip(keys, ("h1", "h2", "out")):
        lp = vp[name]
        kw, kb = jax.random.split(k)
        w_eps = jax.random.normal(kw, lp["w_mu"].shape, jnp.float32)
        b_eps = jax.random.normal(kb, lp["b_mu"].shape, jnp.float32)
        out[name] = dict(w=lp["w_mu"] + _softplus(lp["w_rho"]) * w_eps,
                         b=lp["b_mu"] + _softplus(lp["b_rho"]) * b_eps)
    return out


@jax.jit
def sampled_forward(key, vp, x):
    """One Monte-Carlo sample + forward, fused so per-sample weight prep never round-trips HBM."""
    params = sample_params(key, vp)
    return classifier_bbb_forward(x, params)


def _reference_forward(x, p):
    """Pure-JAX reference for the numerical check."""
    h1 = jax.nn.sigmoid(x @ p["h1"]["w"].T + p["h1"]["b"])
    h2 = jax.nn.sigmoid(h1 @ p["h2"]["w"].T + p["h2"]["b"])
    z = h2 @ p["out"]["w"].T + p["out"]["b"]
    return jax.nn.log_softmax(z, axis=-1)


# TODO(synk): the ELBO bookkeeping (log_prior / log_post / sample_elbo, nll_loss) is host-side
# scalar reduction over the sampled parameters in the PyTorch module; it stays in plain JAX.
# For many MC samples per step, the reparameterization could move in-kernel via
# pltpu.prng_seed / pltpu.prng_random_bits with a sample grid axis.

if __name__ == "__main__":
    # Module implies x.reshape(-1, 2) -> in_dim = 2. batch=144 exercises the balanced
    # two-tile split on v7x (2 x 72 rows) and a single grid step on v5e/v6e.
    batch, in_dim, hidden_dim, out_dim = 144, 2, 32, 2

    key = jax.random.PRNGKey(0)
    k_x, k_init, k_sample = jax.random.split(key, 3)
    x = jax.random.normal(k_x, (batch, in_dim), jnp.float32)
    vp = init_variational_params(k_init, in_dim, hidden_dim, out_dim)

    out = sampled_forward(k_sample, vp, x)
    out = jax.block_until_ready(out)

    params = sample_params(k_sample, vp)          # same key -> identical sample
    ref = _reference_forward(x, params)

    assert out.shape == (batch, out_dim)
    assert jnp.allclose(out, ref, atol=1e-5, rtol=1e-4), "mismatch vs reference"

    print("KERNEL_OK")
</pallas_src>

<mosaic_0001>
module attributes {stable_mosaic.version = 11 : i64} {
  func.func @_classifier_bbb_kernel(%arg0: i32, %arg1: memref<144x2xf32, #tpu.memory_space<vmem>>, %arg2: memref<2x128xf32, #tpu.memory_space<vmem>>, %arg3: memref<1x128xf32, #tpu.memory_space<vmem>>, %arg4: memref<128x128xf32, #tpu.memory_space<vmem>>, %arg5: memref<1x128xf32, #tpu.memory_space<vmem>>, %arg6: memref<128x128xf32, #tpu.memory_space<vmem>>, %arg7: memref<1x128xf32, #tpu.memory_space<vmem>>, %arg8: memref<144x2xf32, #tpu.memory_space<vmem>>) attributes {dimension_semantics = [#tpu.dimension_semantics<parallel>], iteration_bounds = array<i64: 1>, scalar_prefetch = 0 : i64, scratch_operands = 0 : i64, tpu.core_type = #tpu.core_type<tc>, window_params = [{transform_indices = @transform_0, window_bounds = array<i64: 144, 2>}, {pipeline_mode = #tpu.pipeline_mode<synchronous>, transform_indices = @transform_1, window_bounds = array<i64: 2, 128>}, {pipeline_mode = #tpu.pipeline_mode<synchronous>, transform_indices = @transform_2, window_bounds = array<i64: 1, 128>}, {pipeline_mode = #tpu.pipeline_mode<synchronous>, transform_indices = @transform_3, window_bounds = array<i64: 128, 128>}, {pipeline_mode = #tpu.pipeline_mode<synchronous>, transform_indices = @transform_4, window_bounds = array<i64: 1, 128>}, {pipeline_mode = #tpu.pipeline_mode<synchronous>, transform_indices = @transform_5, window_bounds = array<i64: 128, 128>}, {pipeline_mode = #tpu.pipeline_mode<synchronous>, transform_indices = @transform_6, window_bounds = array<i64: 1, 128>}, {transform_indices = @transform_7, window_bounds = array<i64: 144, 2>}]} {
    %c0 = arith.constant 0 : index
    %c0_0 = arith.constant 0 : index
    %0 = vector.load %arg1[%c0, %c0_0] : memref<144x2xf32, #tpu.memory_space<vmem>>, vector<144x2xf32>
    %c0_1 = arith.constant 0 : index
    %c0_2 = arith.constant 0 : index
    %1 = vector.load %arg2[%c0_1, %c0_2] : memref<2x128xf32, #tpu.memory_space<vmem>>, vector<2x128xf32>
    %2 = vector.extract_strided_slice %0 {offsets = [0, 0], sizes = [144, 1], strides = [1, 1]} : vector<144x2xf32> to vector<144x1xf32>
    %3 = vector.extract_strided_slice %1 {offsets = [0, 0], sizes = [1, 128], strides = [1, 1]} : vector<2x128xf32> to vector<1x128xf32>
    %4 = vector.broadcast %2 : vector<144x1xf32> to vector<144x128xf32>
    %5 = vector.broadcast %3 : vector<1x128xf32> to vector<144x128xf32>
    %6 = arith.mulf %4, %5 : vector<144x128xf32>
    %7 = vector.extract_strided_slice %0 {offsets = [0, 1], sizes = [144, 1], strides = [1, 1]} : vector<144x2xf32> to vector<144x1xf32>
    %8 = vector.extract_strided_slice %1 {offsets = [1, 0], sizes = [1, 128], strides = [1, 1]} : vector<2x128xf32> to vector<1x128xf32>
    %9 = vector.broadcast %7 : vector<144x1xf32> to vector<144x128xf32>
    %10 = vector.broadcast %8 : vector<1x128xf32> to vector<144x128xf32>
    %11 = arith.mulf %9, %10 : vector<144x128xf32>
    %12 = arith.addf %6, %11 : vector<144x128xf32>
    %c0_3 = arith.constant 0 : index
    %c0_4 = arith.constant 0 : index
    %13 = vector.load %arg3[%c0_3, %c0_4] : memref<1x128xf32, #tpu.memory_space<vmem>>, vector<1x128xf32>
    %14 = vector.broadcast %13 : vector<1x128xf32> to vector<144x128xf32>
    %15 = arith.addf %12, %14 : vector<144x128xf32>
    %cst = arith.constant 0.000000e+00 : f32
    %16 = vector.broadcast %cst : f32 to vector<144x128xf32>
    %17 = arith.subf %16, %15 : vector<144x128xf32>
    %18 = math.exp %17 : vector<144x128xf32>
    %cst_5 = arith.constant 1.000000e+00 : f32
    %19 = vector.broadcast %cst_5 : f32 to vector<144x128xf32>
    %20 = arith.addf %19, %18 : vector<144x128xf32>
    %21 = tpu.reciprocal %20 : vector<144x128xf32> -> vector<144x128xf32>
    %c0_6 = arith.constant 0 : index
    %c0_7 = arith.constant 0 : index
    %22 = vector.load %arg4[%c0_6, %c0_7] : memref<128x128xf32, #tpu.memory_space<vmem>>, vector<128x128xf32>
    %cst_8 = arith.constant dense<0.000000e+00> : vector<144x128xf32>
    %23 = tpu.matmul %21, %22, %cst_8 {dimension_numbers = #tpu.dot_dimension_numbers<[1], [0], [0], [1], [0, 0, 1, 1], [], []>} : vector<144x128xf32>, vector<128x128xf32>, vector<144x128xf32> -> vector<144x128xf32>
    %c0_9 = arith.constant 0 : index
    %c0_10 = arith.constant 0 : index
    %24 = vector.load %arg5[%c0_9, %c0_10] : memref<1x128xf32, #tpu.memory_space<vmem>>, vector<1x128xf32>
    %25 = vector.broadcast %24 : vector<1x128xf32> to vector<144x128xf32>
    %26 = arith.addf %23, %25 : vector<144x128xf32>
    %cst_11 = arith.constant 0.000000e+00 : f32
    %27 = vector.broadcast %cst_11 : f32 to vector<144x128xf32>
    %28 = arith.subf %27, %26 : vector<144x128xf32>
    %29 = math.exp %28 : vector<144x128xf32>
    %cst_12 = arith.constant 1.000000e+00 : f32
    %30 = vector.broadcast %cst_12 : f32 to vector<144x128xf32>
    %31 = arith.addf %30, %29 : vector<144x128xf32>
    %32 = tpu.reciprocal %31 : vector<144x128xf32> -> vector<144x128xf32>
    %c0_13 = arith.constant 0 : index
    %c0_14 = arith.constant 0 : index
    %33 = vector.load %arg6[%c0_13, %c0_14] : memref<128x128xf32, #tpu.memory_space<vmem>>, vector<128x128xf32>
    %cst_15 = arith.constant dense<0.000000e+00> : vector<144x128xf32>
    %34 = tpu.matmul %32, %33, %cst_15 {dimension_numbers = #tpu.dot_dimension_numbers<[1], [0], [0], [1], [0, 0, 1, 1], [], []>} : vector<144x128xf32>, vector<128x128xf32>, vector<144x128xf32> -> vector<144x128xf32>
    %c0_16 = arith.constant 0 : index
    %c0_17 = arith.constant 0 : index
    %35 = vector.load %arg7[%c0_16, %c0_17] : memref<1x128xf32, #tpu.memory_space<vmem>>, vector<1x128xf32>
    %36 = vector.broadcast %35 : vector<1x128xf32> to vector<144x128xf32>
    %37 = arith.addf %34, %36 : vector<144x128xf32>
    %38 = tpu.iota {dimensions = array<i32: 1>} : vector<144x128xi32>
    %c2_i32 = arith.constant 2 : i32
    %39 = vector.broadcast %c2_i32 : i32 to vector<144x128xi32>
    %40 = arith.cmpi slt, %38, %39 : vector<144x128xi32>
    %cst_18 = arith.constant -1.000000e+30 : f32
    %41 = vector.broadcast %cst_18 : f32 to vector<144x128xf32>
    %42 = arith.select %40, %37, %41 : vector<144x128xi1>, vector<144x128xf32>
    %cst_19 = arith.constant dense<0xFF800000> : vector<144xf32>
    %43 = vector.multi_reduction <maximumf>, %42, %cst_19 [1] : vector<144x128xf32> to vector<144xf32>
    %44 = vector.shape_cast %43 : vector<144xf32> to vector<144x1xf32>
    %45 = vector.broadcast %44 : vector<144x1xf32> to vector<144x128xf32>
    %46 = arith.subf %42, %45 : vector<144x128xf32>
    %47 = math.exp %46 : vector<144x128xf32>
    %cst_20 = arith.constant dense<0.000000e+00> : vector<144xf32>
    %48 = vector.multi_reduction <add>, %47, %cst_20 [1] : vector<144x128xf32> to vector<144xf32>
    %49 = vector.shape_cast %48 : vector<144xf32> to vector<144x1xf32>
    %50 = math.log %49 : vector<144x1xf32>
    %51 = vector.broadcast %50 : vector<144x1xf32> to vector<144x128xf32>
    %52 = arith.subf %46, %51 : vector<144x128xf32>
    %53 = vector.extract_strided_slice %52 {offsets = [0, 0], sizes = [144, 2], strides = [1, 1]} : vector<144x128xf32> to vector<144x2xf32>
    %c0_21 = arith.constant 0 : index
    %c0_22 = arith.constant 0 : index
    %54 = vector.load %arg8[%c0_21, %c0_22] : memref<144x2xf32, #tpu.memory_space<vmem>>, vector<144x2xf32>
    tpu.vector_store %arg8[%c0_21, %c0_22], %53 {strides = array<i32>} : memref<144x2xf32, #tpu.memory_space<vmem>>, vector<144x2xf32>,
    return
  }
  func.func @transform_0(%arg0: i32) -> (i32, i32) {
    %c0_i32 = arith.constant 0 : i32
    %c0_i32_0 = arith.constant 0 : i32
    return %arg0, %c0_i32 : i32, i32
  }
  func.func @transform_1(%arg0: i32) -> (i32, i32) {
    %c0_i32 = arith.constant 0 : i32
    %c0_i32_0 = arith.constant 0 : i32
    %c0_i32_1 = arith.constant 0 : i32
    return %c0_i32, %c0_i32_0 : i32, i32
  }
  func.func @transform_2(%arg0: i32) -> (i32, i32) {
    %c0_i32 = arith.constant 0 : i32
    %c0_i32_0 = arith.constant 0 : i32
    %c0_i32_1 = arith.constant 0 : i32
    return %c0_i32, %c0_i32_0 : i32, i32
  }
  func.func @transform_3(%arg0: i32) -> (i32, i32) {
    %c0_i32 = arith.constant 0 : i32
    %c0_i32_0 = arith.constant 0 : i32
    %c0_i32_1 = arith.constant 0 : i32
    return %c0_i32, %c0_i32_0 : i32, i32
  }
  func.func @transform_4(%arg0: i32) -> (i32, i32) {
    %c0_i32 = arith.constant 0 : i32
    %c0_i32_0 = arith.constant 0 : i32
    %c0_i32_1 = arith.constant 0 : i32
    return %c0_i32, %c0_i32_0 : i32, i32
  }
  func.func @transform_5(%arg0: i32) -> (i32, i32) {
    %c0_i32 = arith.constant 0 : i32
    %c0_i32_0 = arith.constant 0 : i32
    %c0_i32_1 = arith.constant 0 : i32
    return %c0_i32, %c0_i32_0 : i32, i32
  }
  func.func @transform_6(%arg0: i32) -> (i32, i32) {
    %c0_i32 = arith.constant 0 : i32
    %c0_i32_0 = arith.constant 0 : i32
    %c0_i32_1 = arith.constant 0 : i32
    return %c0_i32, %c0_i32_0 : i32, i32
  }
  func.func @transform_7(%arg0: i32) -> (i32, i32) {
    %c0_i32 = arith.constant 0 : i32
    %c0_i32_0 = arith.constant 0 : i32
    return %arg0, %c0_i32 : i32, i32
  }
}

</mosaic_0001>

<llo_original>
// kernel: sampled_forward.1
$region0: #{sampled_forward.1}
  #allocation0 [shape = 'u32[]', space=smem, size = 0x4, offset = 0x4, fixed_abs, tag = 'smem constant byte address 0x4 - core index']
  #allocation1 [shape = 'u32[144,128]{1,0:T(1,128)}', space=vmem, size = 0x12000, scoped, tag = 'internal scratch']
  %s0 = inlined_call_operand.vmem [shape: f32[144,2], index: 0, kind: input, shape index: {}]
  %s1 = inlined_call_operand.vmem [shape: f32[2,128], index: 1, kind: input, shape index: {}]
  %s2 = inlined_call_operand.vmem [shape: f32[1,128], index: 2, kind: input, shape index: {}]
  %s3 = inlined_call_operand.vmem [shape: f32[128,128], index: 3, kind: input, shape index: {}]
  %s4 = inlined_call_operand.vmem [shape: f32[1,128], index: 4, kind: input, shape index: {}]
  %s5 = inlined_call_operand.vmem [shape: f32[128,128], index: 5, kind: input, shape index: {}]
  %s6 = inlined_call_operand.vmem [shape: f32[1,128], index: 6, kind: input, shape index: {}]
  %s7 = inlined_call_operand.vmem [shape: f32[144,2], index: 7, kind: output, shape index: {}]
  %s8 = sld [smem:[#allocation0]]
  $region38: #{sampled_forward.1} parent=0
    _
  %s10 = ssub.s32 1, %s8
  %s11 = scalar_select 0, %s10, %s8
  // Predicated region
  $region2: #{sampled_forward.1} parent=0 // pred_check
    _
  $region3: #{sampled_forward.1} parent=0 // pred_check_branch
    %13 = sbr.rel (0) target = $region5
  $region4: #{sampled_forward.1} parent=0 // pred_region
    _
  $region5: #{sampled_forward.1} parent=0 // pred_fallthru
    _
  // Predicated region
  $region6: #{sampled_forward.1} parent=0 // pred_check
    _
  $region7: #{sampled_forward.1} parent=0 // pred_check_branch
    %15 = sbr.rel (0) target = $region9
  $region8: #{sampled_forward.1} parent=0 // pred_region
    _
  $region9: #{sampled_forward.1} parent=0 // pred_fallthru
    _
  // Predicated region
  $region10: #{sampled_forward.1} parent=0 // pred_check
    _
  $region11: #{sampled_forward.1} parent=0 // pred_check_branch
    %17 = sbr.rel (0) target = $region13
  $region12: #{sampled_forward.1} parent=0 // pred_region
    _
  $region13: #{sampled_forward.1} parent=0 // pred_fallthru
    _
  // Predicated region
  $region14: #{sampled_forward.1} parent=0 // pred_check
    _
  $region15: #{sampled_forward.1} parent=0 // pred_check_branch
    %19 = sbr.rel (0) target = $region17
  $region16: #{sampled_forward.1} parent=0 // pred_region
    _
  $region17: #{sampled_forward.1} parent=0 // pred_fallthru
    _
  // Predicated region
  $region18: #{sampled_forward.1} parent=0 // pred_check
    _
  $region19: #{sampled_forward.1} parent=0 // pred_check_branch
    %21 = sbr.rel (0) target = $region21
  $region20: #{sampled_forward.1} parent=0 // pred_region
    _
  $region21: #{sampled_forward.1} parent=0 // pred_fallthru
    _
  // Predicated region
  $region22: #{sampled_forward.1} parent=0 // pred_check
    _
  $region23: #{sampled_forward.1} parent=0 // pred_check_branch
    %23 = sbr.rel (0) target = $region25
  $region24: #{sampled_forward.1} parent=0 // pred_region
    _
  $region25: #{sampled_forward.1} parent=0 // pred_fallthru
    _
  // Predicated region
  $region26: #{sampled_forward.1} parent=0 // pred_check
    _
  $region27: #{sampled_forward.1} parent=0 // pred_check_branch
    %25 = sbr.rel (0) target = $region29
  $region28: #{sampled_forward.1} parent=0 // pred_region
    _
  $region29: #{sampled_forward.1} parent=0 // pred_fallthru
    _
  %v26 = vld [vmem:[%s0] sm:$0xff]
  %v27 = vld [vmem:[%s0 + $0x8] sm:$0xff]
  %v28 = vld [vmem:[%s0 + $0x10] sm:$0xff]
  %v29 = vld [vmem:[%s0 + $0x18] sm:$0xff]
  %v30 = vld [vmem:[%s0 + $0x20] sm:$0xff]
  %v31 = vld [vmem:[%s0 + $0x28] sm:$0xff]
  %v32 = vld [vmem:[%s0 + $0x30] sm:$0xff]
  %v33 = vld [vmem:[%s0 + $0x38] sm:$0xff]
  %v34 = vld [vmem:[%s0 + $0x40] sm:$0xff]
  %v35 = vld [vmem:[%s0 + $0x48] sm:$0xff]
  %v36 = vld [vmem:[%s0 + $0x50] sm:$0xff]
  %v37 = vld [vmem:[%s0 + $0x58] sm:$0xff]
  %v38 = vld [vmem:[%s0 + $0x60] sm:$0xff]
  %v39 = vld [vmem:[%s0 + $0x68] sm:$0xff]
  %v40 = vld [vmem:[%s0 + $0x70] sm:$0xff]
  %v41 = vld [vmem:[%s0 + $0x78] sm:$0xff]
  %v42 = vld [vmem:[%s0 + $0x80] sm:$0xff]
  %v43 = vld [vmem:[%s0 + $0x88] sm:$0xff]
  %v44 = vld [vmem:[%s1] sm:$0x3]
  %46 = vset.pattern.permute.xlu0 0
  %47 = vperm.xlu0 %46, %v26
  %v48 = vpop.permute.xlu0 %47
  %51 = vset.pattern.permute.xlu0 0
  %52 = vperm.xlu0 %51, %v27
  %v53 = vpop.permute.xlu0 %52
  %56 = vset.pattern.permute.xlu0 0
  %57 = vperm.xlu0 %56, %v28
  %v58 = vpop.permute.xlu0 %57
  %61 = vset.pattern.permute.xlu0 0
  %62 = vperm.xlu0 %61, %v29
  %v63 = vpop.permute.xlu0 %62
  %66 = vset.pattern.permute.xlu0 0
  %67 = vperm.xlu0 %66, %v30
  %v68 = vpop.permute.xlu0 %67
  %71 = vset.pattern.permute.xlu0 0
  %72 = vperm.xlu0 %71, %v31
  %v73 = vpop.permute.xlu0 %72
  %76 = vset.pattern.permute.xlu0 0
  %77 = vperm.xlu0 %76, %v32
  %v78 = vpop.permute.xlu0 %77
  %81 = vset.pattern.permute.xlu0 0
  %82 = vperm.xlu0 %81, %v33
  %v83 = vpop.permute.xlu0 %82
  %86 = vset.pattern.permute.xlu0 0
  %87 = vperm.xlu0 %86, %v34
  %v88 = vpop.permute.xlu0 %87
  %91 = vset.pattern.permute.xlu0 0
  %92 = vperm.xlu0 %91, %v35
  %v93 = vpop.permute.xlu0 %92
  %96 = vset.pattern.permute.xlu0 0
  %97 = vperm.xlu0 %96, %v36
  %v98 = vpop.permute.xlu0 %97
  %101 = vset.pattern.permute.xlu0 0
  %102 = vperm.xlu0 %101, %v37
  %v103 = vpop.permute.xlu0 %102
  %106 = vset.pattern.permute.xlu0 0
  %107 = vperm.xlu0 %106, %v38
  %v108 = vpop.permute.xlu0 %107
  %111 = vset.pattern.permute.xlu0 0
  %112 = vperm.xlu0 %111, %v39
  %v113 = vpop.permute.xlu0 %112
  %116 = vset.pattern.permute.xlu0 0
  %117 = vperm.xlu0 %116, %v40
  %v118 = vpop.permute.xlu0 %117
  %121 = vset.pattern.permute.xlu0 0
  %122 = vperm.xlu0 %121, %v41
  %v123 = vpop.permute.xlu0 %122
  %126 = vset.pattern.permute.xlu0 0
  %127 = vperm.xlu0 %126, %v42
  %v128 = vpop.permute.xlu0 %127
  %131 = vset.pattern.permute.xlu0 0
  %132 = vperm.xlu0 %131, %v43
  %v133 = vpop.permute.xlu0 %132
  %v135 = vlaneseq
  %v136 = vshrl.u32 %v135, 7
  %v137 = vsub.s32 0, %v136
  %v138 = vrot.slane %v44, %v137
  %v139 = vmul.f32 %v48, %v138
  %v140 = vmul.f32 %v53, %v138
  %v141 = vmul.f32 %v58, %v138
  %v142 = vmul.f32 %v63, %v138
  %v143 = vmul.f32 %v68, %v138
  %v144 = vmul.f32 %v73, %v138
  %v145 = vmul.f32 %v78, %v138
  %v146 = vmul.f32 %v83, %v138
  %v147 = vmul.f32 %v88, %v138
  %v148 = vmul.f32 %v93, %v138
  %v149 = vmul.f32 %v98, %v138
  %v150 = vmul.f32 %v103, %v138
  %v151 = vmul.f32 %v108, %v138
  %v152 = vmul.f32 %v113, %v138
  %v153 = vmul.f32 %v118, %v138
  %v154 = vmul.f32 %v123, %v138
  %v155 = vmul.f32 %v128, %v138
  %v156 = vmul.f32 %v133, %v138
  %157 = vset.pattern.permute.xlu0 1
  %158 = vperm.xlu0 %157, %v26
  %v159 = vpop.permute.xlu0 %158
  %161 = vset.pattern.permute.xlu0 1
  %162 = vperm.xlu0 %161, %v27
  %v163 = vpop.permute.xlu0 %162
  %165 = vset.pattern.permute.xlu0 1
  %166 = vperm.xlu0 %165, %v28
  %v167 = vpop.permute.xlu0 %166
  %169 = vset.pattern.permute.xlu0 1
  %170 = vperm.xlu0 %169, %v29
  %v171 = vpop.permute.xlu0 %170
  %173 = vset.pattern.permute.xlu0 1
  %174 = vperm.xlu0 %173, %v30
  %v175 = vpop.permute.xlu0 %174
  %177 = vset.pattern.permute.xlu0 1
  %178 = vperm.xlu0 %177, %v31
  %v179 = vpop.permute.xlu0 %178
  %181 = vset.pattern.permute.xlu0 1
  %182 = vperm.xlu0 %181, %v32
  %v183 = vpop.permute.xlu0 %182
  %185 = vset.pattern.permute.xlu0 1
  %186 = vperm.xlu0 %185, %v33
  %v187 = vpop.permute.xlu0 %186
  %189 = vset.pattern.permute.xlu0 1
  %190 = vperm.xlu0 %189, %v34
  %v191 = vpop.permute.xlu0 %190
  %193 = vset.pattern.permute.xlu0 1
  %194 = vperm.xlu0 %193, %v35
  %v195 = vpop.permute.xlu0 %194
  %197 = vset.pattern.permute.xlu0 1
  %198 = vperm.xlu0 %197, %v36
  %v199 = vpop.permute.xlu0 %198
  %201 = vset.pattern.permute.xlu0 1
  %202 = vperm.xlu0 %201, %v37
  %v203 = vpop.permute.xlu0 %202
  %205 = vset.pattern.permute.xlu0 1
  %206 = vperm.xlu0 %205, %v38
  %v207 = vpop.permute.xlu0 %206
  %209 = vset.pattern.permute.xlu0 1
  %210 = vperm.xlu0 %209, %v39
  %v211 = vpop.permute.xlu0 %210
  %213 = vset.pattern.permute.xlu0 1
  %214 = vperm.xlu0 %213, %v40
  %v215 = vpop.permute.xlu0 %214
  %217 = vset.pattern.permute.xlu0 1
  %218 = vperm.xlu0 %217, %v41
  %v219 = vpop.permute.xlu0 %218
  %221 = vset.pattern.permute.xlu0 1
  %222 = vperm.xlu0 %221, %v42
  %v223 = vpop.permute.xlu0 %222
  %225 = vset.pattern.permute.xlu0 1
  %226 = vperm.xlu0 %225, %v43
  %v227 = vpop.permute.xlu0 %226
  %v229 = vlaneseq
  %v230 = vshrl.u32 %v229, 7
  %v231 = vsub.s32 1, %v230
  %v232 = vrot.slane %v44, %v231
  %v233 = vmul.f32 %v159, %v232
  %v234 = vmul.f32 %v163, %v232
  %v235 = vmul.f32 %v167, %v232
  %v236 = vmul.f32 %v171, %v232
  %v237 = vmul.f32 %v175, %v232
  %v238 = vmul.f32 %v179, %v232
  %v239 = vmul.f32 %v183, %v232
  %v240 = vmul.f32 %v187, %v232
  %v241 = vmul.f32 %v191, %v232
  %v242 = vmul.f32 %v195, %v232
  %v243 = vmul.f32 %v199, %v232
  %v244 = vmul.f32 %v203, %v232
  %v245 = vmul.f32 %v207, %v232
  %v246 = vmul.f32 %v211, %v232
  %v247 = vmul.f32 %v215, %v232
  %v248 = vmul.f32 %v219, %v232
  %v249 = vmul.f32 %v223, %v232
  %v250 = vmul.f32 %v227, %v232
  %v251 = vadd.f32 %v139, %v233
  %v252 = vadd.f32 %v140, %v234
  %v253 = vadd.f32 %v141, %v235
  %v254 = vadd.f32 %v142, %v236
  %v255 = vadd.f32 %v143, %v237
  %v256 = vadd.f32 %v144, %v238
  %v257 = vadd.f32 %v145, %v239
  %v258 = vadd.f32 %v146, %v240
  %v259 = vadd.f32 %v147, %v241
  %v260 = vadd.f32 %v148, %v242
  %v261 = vadd.f32 %v149, %v243
  %v262 = vadd.f32 %v150, %v244
  %v263 = vadd.f32 %v151, %v245
  %v264 = vadd.f32 %v152, %v246
  %v265 = vadd.f32 %v153, %v247
  %v266 = vadd.f32 %v154, %v248
  %v267 = vadd.f32 %v155, %v249
  %v268 = vadd.f32 %v156, %v250
  %v269 = vld [vmem:[%s2] sm:$0x1]
  %v271 = vlaneseq
  %v272 = vshrl.u32 %v271, 7
  %v273 = vsub.s32 0, %v272
  %v274 = vrot.slane %v269, %v273
  %v276 = vadd.f32 %v251, %v274
  %v277 = vadd.f32 %v252, %v274
  %v278 = vadd.f32 %v253, %v274
  %v279 = vadd.f32 %v254, %v274
  %v280 = vadd.f32 %v255, %v274
  %v281 = vadd.f32 %v256, %v274
  %v282 = vadd.f32 %v257, %v274
  %v283 = vadd.f32 %v258, %v274
  %v284 = vadd.f32 %v259, %v274
  %v285 = vadd.f32 %v260, %v274
  %v286 = vadd.f32 %v261, %v274
  %v287 = vadd.f32 %v262, %v274
  %v288 = vadd.f32 %v263, %v274
  %v289 = vadd.f32 %v264, %v274
  %v290 = vadd.f32 %v265, %v274
  %v291 = vadd.f32 %v266, %v274
  %v292 = vadd.f32 %v267, %v274
  %v293 = vadd.f32 %v268, %v274
  %v294 = vsub.f32 0.0, %v276
  %v295 = vsub.f32 0.0, %v277
  %v296 = vsub.f32 0.0, %v278
  %v297 = vsub.f32 0.0, %v279
  %v298 = vsub.f32 0.0, %v280
  %v299 = vsub.f32 0.0, %v281
  %v300 = vsub.f32 0.0, %v282
  %v301 = vsub.f32 0.0, %v283
  %v302 = vsub.f32 0.0, %v284
  %v303 = vsub.f32 0.0, %v285
  %v304 = vsub.f32 0.0, %v286
  %v305 = vsub.f32 0.0, %v287
  %v306 = vsub.f32 0.0, %v288
  %v307 = vsub.f32 0.0, %v289
  %v308 = vsub.f32 0.0, %v290
  %v309 = vsub.f32 0.0, %v291
  %v310 = vsub.f32 0.0, %v292
  %v311 = vsub.f32 0.0, %v293
  %v312 = vmul.f32 %v294, 1.442695
  %v313 = vpow.pop %v312
  %v314 = vmul.f32 %v295, 1.442695
  %v315 = vpow.pop %v314
  %v316 = vmul.f32 %v296, 1.442695
  %v317 = vpow.pop %v316
  %v318 = vmul.f32 %v297, 1.442695
  %v319 = vpow.pop %v318
  %v320 = vmul.f32 %v298, 1.442695
  %v321 = vpow.pop %v320
  %v322 = vmul.f32 %v299, 1.442695
  %v323 = vpow.pop %v322
  %v324 = vmul.f32 %v300, 1.442695
  %v325 = vpow.pop %v324
  %v326 = vmul.f32 %v301, 1.442695
  %v327 = vpow.pop %v326
  %v328 = vmul.f32 %v302, 1.442695
  %v329 = vpow.pop %v328
  %v330 = vmul.f32 %v303, 1.442695
  %v331 = vpow.pop %v330
  %v332 = vmul.f32 %v304, 1.442695
  %v333 = vpow.pop %v332
  %v334 = vmul.f32 %v305, 1.442695
  %v335 = vpow.pop %v334
  %v336 = vmul.f32 %v306, 1.442695
  %v337 = vpow.pop %v336
  %v338 = vmul.f32 %v307, 1.442695
  %v339 = vpow.pop %v338
  %v340 = vmul.f32 %v308, 1.442695
  %v341 = vpow.pop %v340
  %v342 = vmul.f32 %v309, 1.442695
  %v343 = vpow.pop %v342
  %v344 = vmul.f32 %v310, 1.442695
  %v345 = vpow.pop %v344
  %v346 = vmul.f32 %v311, 1.442695
  %v347 = vpow.pop %v346
  %v348 = vadd.f32 %v313, 1.0
  %v349 = vadd.f32 %v315, 1.0
  %v350 = vadd.f32 %v317, 1.0
  %v351 = vadd.f32 %v319, 1.0
  %v352 = vadd.f32 %v321, 1.0
  %v353 = vadd.f32 %v323, 1.0
  %v354 = vadd.f32 %v325, 1.0
  %v355 = vadd.f32 %v327, 1.0
  %v356 = vadd.f32 %v329, 1.0
  %v357 = vadd.f32 %v331, 1.0
  %v358 = vadd.f32 %v333, 1.0
  %v359 = vadd.f32 %v335, 1.0
  %v360 = vadd.f32 %v337, 1.0
  %v361 = vadd.f32 %v339, 1.0
  %v362 = vadd.f32 %v341, 1.0
  %v363 = vadd.f32 %v343, 1.0
  %v364 = vadd.f32 %v345, 1.0
  %v365 = vadd.f32 %v347, 1.0
  %v366 = vrcp.pop %v348
  %v367 = vrcp.pop %v349
  %v368 = vrcp.pop %v350
  %v369 = vrcp.pop %v351
  %v370 = vrcp.pop %v352
  %v371 = vrcp.pop %v353
  %v372 = vrcp.pop %v354
  %v373 = vrcp.pop %v355
  %v374 = vrcp.pop %v356
  %v375 = vrcp.pop %v357
  %v376 = vrcp.pop %v358
  %v377 = vrcp.pop %v359
  %v378 = vrcp.pop %v360
  %v379 = vrcp.pop %v361
  %v380 = vrcp.pop %v362
  %v381 = vrcp.pop %v363
  %v382 = vrcp.pop %v364
  %v383 = vrcp.pop %v365
  %v384 = vld [vmem:[%s3] sm:$0xff]
  %v385 = vld [vmem:[%s3 + $0x8] sm:$0xff]
  %v386 = vld [vmem:[%s3 + $0x10] sm:$0xff]
  %v387 = vld [vmem:[%s3 + $0x18] sm:$0xff]
  %v388 = vld [vmem:[%s3 + $0x20] sm:$0xff]
  %v389 = vld [vmem:[%s3 + $0x28] sm:$0xff]
  %v390 = vld [vmem:[%s3 + $0x30] sm:$0xff]
  %v391 = vld [vmem:[%s3 + $0x38] sm:$0xff]
  %v392 = vld [vmem:[%s3 + $0x40] sm:$0xff]
  %v393 = vld [vmem:[%s3 + $0x48] sm:$0xff]
  %v394 = vld [vmem:[%s3 + $0x50] sm:$0xff]
  %v395 = vld [vmem:[%s3 + $0x58] sm:$0xff]
  %v396 = vld [vmem:[%s3 + $0x60] sm:$0xff]
  %v397 = vld [vmem:[%s3 + $0x68] sm:$0xff]
  %v398 = vld [vmem:[%s3 + $0x70] sm:$0xff]
  %v399 = vld [vmem:[%s3 + $0x78] sm:$0xff]
  %v400 = vld [vmem:[%s4] sm:$0x1]
  %v402 = vlaneseq
  %v403 = vshrl.u32 %v402, 7
  %v404 = vsub.s32 0, %v403
  %v405 = vrot.slane %v400, %v404
  %407 = vmatprep.subr.mxu0 0.0
  %408 = vmatpush1.msra.mxu0 %v384
  %409 = vmatprep.subr.mxu0 0.0
  %410 = vmatpush1.msra.mxu0 %v385
  %411 = vmatprep.subr.mxu0 0.0
  %412 = vmatpush1.msra.mxu0 %v386
  %413 = vmatprep.subr.mxu0 0.0
  %414 = vmatpush1.msra.mxu0 %v387
  %415 = vmatprep.subr.mxu0 0.0
  %416 = vmatpush1.msra.mxu0 %v388
  %417 = vmatprep.subr.mxu0 0.0
  %418 = vmatpush1.msra.mxu0 %v389
  %419 = vmatprep.subr.mxu0 0.0
  %420 = vmatpush1.msra.mxu0 %v390
  %421 = vmatprep.subr.mxu0 0.0
  %422 = vmatpush1.msra.mxu0 %v391
  %423 = vmatprep.subr.mxu0 0.0
  %424 = vmatpush1.msra.mxu0 %v392
  %425 = vmatprep.subr.mxu0 0.0
  %426 = vmatpush1.msra.mxu0 %v393
  %427 = vmatprep.subr.mxu0 0.0
  %428 = vmatpush1.msra.mxu0 %v394
  %429 = vmatprep.subr.mxu0 0.0
  %430 = vmatpush1.msra.mxu0 %v395
  %431 = vmatprep.subr.mxu0 0.0
  %432 = vmatpush1.msra.mxu0 %v396
  %433 = vmatprep.subr.mxu0 0.0
  %434 = vmatpush1.msra.mxu0 %v397
  %435 = vmatprep.subr.mxu0 0.0
  %436 = vmatpush1.msra.mxu0 %v398
  %437 = vmatprep.subr.mxu0 0.0
  %438 = vmatpush1.msra.mxu0 %v399
  %439 = vmatprep.subr.mxu0 0.0
  %440 = vmatpush1.msra.mxu0 0.0
  %441 = vmatprep.subr.mxu0 0.0
  %442 = vmatpush1.msra.mxu0 0.0
  %443 = vmatprep.subr.mxu0 0.0
  %444 = vmatpush1.msra.mxu0 0.0
  %445 = vmatprep.subr.mxu0 0.0
  %446 = vmatpush1.msra.mxu0 0.0
  %447 = vmatprep.subr.mxu0 0.0
  %448 = vmatpush1.msra.mxu0 0.0
  %449 = vmatprep.subr.mxu0 0.0
  %450 = vmatpush1.msra.mxu0 0.0
  %451 = vmatprep.subr.mxu0 0.0
  %452 = vmatpush1.msra.mxu0 0.0
  %453 = vmatprep.subr.mxu0 0.0
  %454 = vmatpush1.msra.mxu0 0.0
  %455 = vmatprep.subr.mxu0 0.0
  %456 = vmatpush1.msra.mxu0 0.0
  %457 = vmatprep.subr.mxu0 0.0
  %458 = vmatpush1.msra.mxu0 0.0
  %459 = vmatprep.subr.mxu0 0.0
  %460 = vmatpush1.msra.mxu0 0.0
  %461 = vmatprep.subr.mxu0 0.0
  %462 = vmatpush1.msra.mxu0 0.0
  %463 = vmatprep.subr.mxu0 0.0
  %464 = vmatpush1.msra.mxu0 0.0
  %465 = vmatprep.subr.mxu0 0.0
  %466 = vmatpush1.msra.mxu0 0.0
  %467 = vmatprep.subr.mxu0 0.0
  %468 = vmatpush1.msra.mxu0 0.0
  %469 = vmatprep.subr.mxu0 0.0
  %470 = vmatpush1.msra.mxu0 0.0
  %471 = vmatprep.mubr.f32.mxu0 0.0
  %472 = vmatmul.mubr.f32.gmra.mrb[0].mxu0 %v366
  %v473 = vpop.f32.mrb[0].mxu0
  %v474 = vadd.f32 %v405, %v473
  %v475 = vpop.f32.mrb[0].mxu0
  %476 = vmatprep.mubr.f32.mxu0 0.0
  %477 = vmatmul.mubr.f32.gmra.mrb[0].mxu0 %v367
  %v478 = vpop.f32.mrb[0].mxu0
  %v479 = vadd.f32 %v405, %v478
  %v480 = vpop.f32.mrb[0].mxu0
  %481 = vmatprep.mubr.f32.mxu0 0.0
  %482 = vmatmul.mubr.f32.gmra.mrb[0].mxu0 %v368
  %v483 = vpop.f32.mrb[0].mxu0
  %v484 = vadd.f32 %v405, %v483
  %v485 = vpop.f32.mrb[0].mxu0
  %486 = vmatprep.mubr.f32.mxu0 0.0
  %487 = vmatmul.mubr.f32.gmra.mrb[0].mxu0 %v369
  %v488 = vpop.f32.mrb[0].mxu0
  %v489 = vadd.f32 %v405, %v488
  %v490 = vpop.f32.mrb[0].mxu0
  %491 = vmatprep.mubr.f32.mxu0 0.0
  %492 = vmatmul.mubr.f32.gmra.mrb[0].mxu0 %v370
  %v493 = vpop.f32.mrb[0].mxu0
  %v494 = vadd.f32 %v405, %v493
  %v495 = vpop.f32.mrb[0].mxu0
  %496 = vmatprep.mubr.f32.mxu0 0.0
  %497 = vmatmul.mubr.f32.gmra.mrb[0].mxu0 %v371
  %v498 = vpop.f32.mrb[0].mxu0
  %v499 = vadd.f32 %v405, %v498
  %v500 = vpop.f32.mrb[0].mxu0
  %501 = vmatprep.mubr.f32.mxu0 0.0
  %502 = vmatmul.mubr.f32.gmra.mrb[0].mxu0 %v372
  %v503 = vpop.f32.mrb[0].mxu0
  %v504 = vadd.f32 %v405, %v503
  %v505 = vpop.f32.mrb[0].mxu0
  %506 = vmatprep.mubr.f32.mxu0 0.0
  %507 = vmatmul.mubr.f32.gmra.mrb[0].mxu0 %v373
  %v508 = vpop.f32.mrb[0].mxu0
  %v509 = vadd.f32 %v405, %v508
  %v510 = vpop.f32.mrb[0].mxu0
  %511 = vmatprep.mubr.f32.mxu0 0.0
  %512 = vmatmul.mubr.f32.gmra.mrb[0].mxu0 %v374
  %v513 = vpop.f32.mrb[0].mxu0
  %v514 = vadd.f32 %v405, %v513
  %v515 = vpop.f32.mrb[0].mxu0
  %516 = vmatprep.mubr.f32.mxu0 0.0
  %517 = vmatmul.mubr.f32.gmra.mrb[0].mxu0 %v375
  %v518 = vpop.f32.mrb[0].mxu0
  %v519 = vadd.f32 %v405, %v518
  %v520 = vpop.f32.mrb[0].mxu0
  %521 = vmatprep.mubr.f32.mxu0 0.0
  %522 = vmatmul.mubr.f32.gmra.mrb[0].mxu0 %v376
  %v523 = vpop.f32.mrb[0].mxu0
  %v524 = vadd.f32 %v405, %v523
  %v525 = vpop.f32.mrb[0].mxu0
  %526 = vmatprep.mubr.f32.mxu0 0.0
  %527 = vmatmul.mubr.f32.gmra.mrb[0].mxu0 %v377
  %v528 = vpop.f32.mrb[0].mxu0
  %v529 = vadd.f32 %v405, %v528
  %v530 = vpop.f32.mrb[0].mxu0
  %531 = vmatprep.mubr.f32.mxu0 0.0
  %532 = vmatmul.mubr.f32.gmra.mrb[0].mxu0 %v378
  %v533 = vpop.f32.mrb[0].mxu0
  %v534 = vadd.f32 %v405, %v533
  %v535 = vpop.f32.mrb[0].mxu0
  %536 = vmatprep.mubr.f32.mxu0 0.0
  %537 = vmatmul.mubr.f32.gmra.mrb[0].mxu0 %v379
  %v538 = vpop.f32.mrb[0].mxu0
  %v539 = vadd.f32 %v405, %v538
  %v540 = vpop.f32.mrb[0].mxu0
  %541 = vmatprep.mubr.f32.mxu0 0.0
  %542 = vmatmul.mubr.f32.gmra.mrb[0].mxu0 %v380
  %v543 = vpop.f32.mrb[0].mxu0
  %v544 = vadd.f32 %v405, %v543
  %v545 = vpop.f32.mrb[0].mxu0
  %546 = vmatprep.mubr.f32.mxu0 0.0
  %547 = vmatmul.mubr.f32.gmra.mrb[0].mxu0 %v381
  %v548 = vpop.f32.mrb[0].mxu0
  %v549 = vadd.f32 %v405, %v548
  %v550 = vpop.f32.mrb[0].mxu0
  %551 = vmatprep.mubr.f32.mxu0 0.0
  %552 = vmatmul.mubr.f32.gmra.mrb[0].mxu0 %v382
  %v553 = vpop.f32.mrb[0].mxu0
  %v554 = vadd.f32 %v405, %v553
  %v555 = vpop.f32.mrb[0].mxu0
  %556 = vmatprep.mubr.f32.mxu0 0.0
  %557 = vmatmul.mubr.f32.gmra.mrb[0].mxu0 %v383
  %v558 = vpop.f32.mrb[0].mxu0
  %v559 = vadd.f32 %v405, %v558
  %v560 = vpop.f32.mrb[0].mxu0
  %561 = vdwg.mxu0
  %v562 = vsub.f32 0.0, %v474
  %v563 = vsub.f32 0.0, %v479
  %v564 = vsub.f32 0.0, %v484
  %v565 = vsub.f32 0.0, %v489
  %v566 = vsub.f32 0.0, %v494
  %v567 = vsub.f32 0.0, %v499
  %v568 = vsub.f32 0.0, %v504
  %v569 = vsub.f32 0.0, %v509
  %v570 = vsub.f32 0.0, %v514
  %v571 = vsub.f32 0.0, %v519
  %v572 = vsub.f32 0.0, %v524
  %v573 = vsub.f32 0.0, %v529
  %v574 = vsub.f32 0.0, %v534
  %v575 = vsub.f32 0.0, %v539
  %v576 = vsub.f32 0.0, %v544
  %v577 = vsub.f32 0.0, %v549
  %v578 = vsub.f32 0.0, %v554
  %v579 = vsub.f32 0.0, %v559
  %v580 = vmul.f32 %v562, 1.442695
  %v581 = vpow.pop %v580
  %v582 = vmul.f32 %v563, 1.442695
  %v583 = vpow.pop %v582
  %v584 = vmul.f32 %v564, 1.442695
  %v585 = vpow.pop %v584
  %v586 = vmul.f32 %v565, 1.442695
  %v587 = vpow.pop %v586
  %v588 = vmul.f32 %v566, 1.442695
  %v589 = vpow.pop %v588
  %v590 = vmul.f32 %v567, 1.442695
  %v591 = vpow.pop %v590
  %v592 = vmul.f32 %v568, 1.442695
  %v593 = vpow.pop %v592
  %v594 = vmul.f32 %v569, 1.442695
  %v595 = vpow.pop %v594
  %v596 = vmul.f32 %v570, 1.442695
  %v597 = vpow.pop %v596
  %v598 = vmul.f32 %v571, 1.442695
  %v599 = vpow.pop %v598
  %v600 = vmul.f32 %v572, 1.442695
  %v601 = vpow.pop %v600
  %v602 = vmul.f32 %v573, 1.442695
  %v603 = vpow.pop %v602
  %v604 = vmul.f32 %v574, 1.442695
  %v605 = vpow.pop %v604
  %v606 = vmul.f32 %v575, 1.442695
  %v607 = vpow.pop %v606
  %v608 = vmul.f32 %v576, 1.442695
  %v609 = vpow.pop %v608
  %v610 = vmul.f32 %v577, 1.442695
  %v611 = vpow.pop %v610
  %v612 = vmul.f32 %v578, 1.442695
  %v613 = vpow.pop %v612
  %v614 = vmul.f32 %v579, 1.442695
  %v615 = vpow.pop %v614
  %v616 = vadd.f32 %v581, 1.0
  %v617 = vadd.f32 %v583, 1.0
  %v618 = vadd.f32 %v585, 1.0
  %v619 = vadd.f32 %v587, 1.0
  %v620 = vadd.f32 %v589, 1.0
  %v621 = vadd.f32 %v591, 1.0
  %v622 = vadd.f32 %v593, 1.0
  %v623 = vadd.f32 %v595, 1.0
  %v624 = vadd.f32 %v597, 1.0
  %v625 = vadd.f32 %v599, 1.0
  %v626 = vadd.f32 %v601, 1.0
  %v627 = vadd.f32 %v603, 1.0
  %v628 = vadd.f32 %v605, 1.0
  %v629 = vadd.f32 %v607, 1.0
  %v630 = vadd.f32 %v609, 1.0
  %v631 = vadd.f32 %v611, 1.0
  %v632 = vadd.f32 %v613, 1.0
  %v633 = vadd.f32 %v615, 1.0
  %v634 = vrcp.pop %v616
  %v635 = vrcp.pop %v617
  %v636 = vrcp.pop %v618
  %v637 = vrcp.pop %v619
  %v638 = vrcp.pop %v620
  %v639 = vrcp.pop %v621
  %v640 = vrcp.pop %v622
  %v641 = vrcp.pop %v623
  %v642 = vrcp.pop %v624
  %v643 = vrcp.pop %v625
  %v644 = vrcp.pop %v626
  %v645 = vrcp.pop %v627
  %v646 = vrcp.pop %v628
  %v647 = vrcp.pop %v629
  %v648 = vrcp.pop %v630
  %v649 = vrcp.pop %v631
  %v650 = vrcp.pop %v632
  %v651 = vrcp.pop %v633
  %v652 = vld [vmem:[%s5] sm:$0xff]
  %v653 = vld [vmem:[%s5 + $0x8] sm:$0xff]
  %v654 = vld [vmem:[%s5 + $0x10] sm:$0xff]
  %v655 = vld [vmem:[%s5 + $0x18] sm:$0xff]
  %v656 = vld [vmem:[%s5 + $0x20] sm:$0xff]
  %v657 = vld [vmem:[%s5 + $0x28] sm:$0xff]
  %v658 = vld [vmem:[%s5 + $0x30] sm:$0xff]
  %v659 = vld [vmem:[%s5 + $0x38] sm:$0xff]
  %v660 = vld [vmem:[%s5 + $0x40] sm:$0xff]
  %v661 = vld [vmem:[%s5 + $0x48] sm:$0xff]
  %v662 = vld [vmem:[%s5 + $0x50] sm:$0xff]
  %v663 = vld [vmem:[%s5 + $0x58] sm:$0xff]
  %v664 = vld [vmem:[%s5 + $0x60] sm:$0xff]
  %v665 = vld [vmem:[%s5 + $0x68] sm:$0xff]
  %v666 = vld [vmem:[%s5 + $0x70] sm:$0xff]
  %v667 = vld [vmem:[%s5 + $0x78] sm:$0xff]
  %v668 = vld [vmem:[%s6] sm:$0x1]
  %v670 = vlaneseq
  %v671 = vshrl.u32 %v670, 7
  %v672 = vsub.s32 0, %v671
  %v673 = vrot.slane %v668, %v672
  %675 = vmatprep.subr.mxu0 0.0
  %676 = vmatpush1.msra.mxu0 %v652
  %677 = vmatprep.subr.mxu0 0.0
  %678 = vmatpush1.msra.mxu0 %v653
  %679 = vmatprep.subr.mxu0 0.0
  %680 = vmatpush1.msra.mxu0 %v654
  %681 = vmatprep.subr.mxu0 0.0
  %682 = vmatpush1.msra.mxu0 %v655
  %683 = vmatprep.subr.mxu0 0.0
  %684 = vmatpush1.msra.mxu0 %v656
  %685 = vmatprep.subr.mxu0 0.0
  %686 = vmatpush1.msra.mxu0 %v657
  %687 = vmatprep.subr.mxu0 0.0
  %688 = vmatpush1.msra.mxu0 %v658
  %689 = vmatprep.subr.mxu0 0.0
  %690 = vmatpush1.msra.mxu0 %v659
  %691 = vmatprep.subr.mxu0 0.0
  %692 = vmatpush1.msra.mxu0 %v660
  %693 = vmatprep.subr.mxu0 0.0
  %694 = vmatpush1.msra.mxu0 %v661
  %695 = vmatprep.subr.mxu0 0.0
  %696 = vmatpush1.msra.mxu0 %v662
  %697 = vmatprep.subr.mxu0 0.0
  %698 = vmatpush1.msra.mxu0 %v663
  %699 = vmatprep.subr.mxu0 0.0
  %700 = vmatpush1.msra.mxu0 %v664
  %701 = vmatprep.subr.mxu0 0.0
  %702 = vmatpush1.msra.mxu0 %v665
  %703 = vmatprep.subr.mxu0 0.0
  %704 = vmatpush1.msra.mxu0 %v666
  %705 = vmatprep.subr.mxu0 0.0
  %706 = vmatpush1.msra.mxu0 %v667
  %707 = vmatprep.subr.mxu0 0.0
  %708 = vmatpush1.msra.mxu0 0.0
  %709 = vmatprep.subr.mxu0 0.0
  %710 = vmatpush1.msra.mxu0 0.0
  %711 = vmatprep.subr.mxu0 0.0
  %712 = vmatpush1.msra.mxu0 0.0
  %713 = vmatprep.subr.mxu0 0.0
  %714 = vmatpush1.msra.mxu0 0.0
  %715 = vmatprep.subr.mxu0 0.0
  %716 = vmatpush1.msra.mxu0 0.0
  %717 = vmatprep.subr.mxu0 0.0
  %718 = vmatpush1.msra.mxu0 0.0
  %719 = vmatprep.subr.mxu0 0.0
  %720 = vmatpush1.msra.mxu0 0.0
  %721 = vmatprep.subr.mxu0 0.0
  %722 = vmatpush1.msra.mxu0 0.0
  %723 = vmatprep.subr.mxu0 0.0
  %724 = vmatpush1.msra.mxu0 0.0
  %725 = vmatprep.subr.mxu0 0.0
  %726 = vmatpush1.msra.mxu0 0.0
  %727 = vmatprep.subr.mxu0 0.0
  %728 = vmatpush1.msra.mxu0 0.0
  %729 = vmatprep.subr.mxu0 0.0
  %730 = vmatpush1.msra.mxu0 0.0
  %731 = vmatprep.subr.mxu0 0.0
  %732 = vmatpush1.msra.mxu0 0.0
  %733 = vmatprep.subr.mxu0 0.0
  %734 = vmatpush1.msra.mxu0 0.0
  %735 = vmatprep.subr.mxu0 0.0
  %736 = vmatpush1.msra.mxu0 0.0
  %737 = vmatprep.subr.mxu0 0.0
  %738 = vmatpush1.msra.mxu0 0.0
  %739 = vmatprep.mubr.f32.mxu0 0.0
  %740 = vmatmul.mubr.f32.gmra.mrb[0].mxu0 %v634
  %v741 = vpop.f32.mrb[0].mxu0
  %v742 = vadd.f32 %v673, %v741
  %v743 = vpop.f32.mrb[0].mxu0
  %744 = vmatprep.mubr.f32.mxu0 0.0
  %745 = vmatmul.mubr.f32.gmra.mrb[0].mxu0 %v635
  %v746 = vpop.f32.mrb[0].mxu0
  %v747 = vadd.f32 %v673, %v746
  %v748 = vpop.f32.mrb[0].mxu0
  %749 = vmatprep.mubr.f32.mxu0 0.0
  %750 = vmatmul.mubr.f32.gmra.mrb[0].mxu0 %v636
  %v751 = vpop.f32.mrb[0].mxu0
  %v752 = vadd.f32 %v673, %v751
  %v753 = vpop.f32.mrb[0].mxu0
  %754 = vmatprep.mubr.f32.mxu0 0.0
  %755 = vmatmul.mubr.f32.gmra.mrb[0].mxu0 %v637
  %v756 = vpop.f32.mrb[0].mxu0
  %v757 = vadd.f32 %v673, %v756
  %v758 = vpop.f32.mrb[0].mxu0
  %759 = vmatprep.mubr.f32.mxu0 0.0
  %760 = vmatmul.mubr.f32.gmra.mrb[0].mxu0 %v638
  %v761 = vpop.f32.mrb[0].mxu0
  %v762 = vadd.f32 %v673, %v761
  %v763 = vpop.f32.mrb[0].mxu0
  %764 = vmatprep.mubr.f32.mxu0 0.0
  %765 = vmatmul.mubr.f32.gmra.mrb[0].mxu0 %v639
  %v766 = vpop.f32.mrb[0].mxu0
  %v767 = vadd.f32 %v673, %v766
  %v768 = vpop.f32.mrb[0].mxu0
  %769 = vmatprep.mubr.f32.mxu0 0.0
  %770 = vmatmul.mubr.f32.gmra.mrb[0].mxu0 %v640
  %v771 = vpop.f32.mrb[0].mxu0
  %v772 = vadd.f32 %v673, %v771
  %v773 = vpop.f32.mrb[0].mxu0
  %774 = vmatprep.mubr.f32.mxu0 0.0
  %775 = vmatmul.mubr.f32.gmra.mrb[0].mxu0 %v641
  %v776 = vpop.f32.mrb[0].mxu0
  %v777 = vadd.f32 %v673, %v776
  %v778 = vpop.f32.mrb[0].mxu0
  %779 = vmatprep.mubr.f32.mxu0 0.0
  %780 = vmatmul.mubr.f32.gmra.mrb[0].mxu0 %v642
  %v781 = vpop.f32.mrb[0].mxu0
  %v782 = vadd.f32 %v673, %v781
  %v783 = vpop.f32.mrb[0].mxu0
  %784 = vmatprep.mubr.f32.mxu0 0.0
  %785 = vmatmul.mubr.f32.gmra.mrb[0].mxu0 %v643
  %v786 = vpop.f32.mrb[0].mxu0
  %v787 = vadd.f32 %v673, %v786
  %v788 = vpop.f32.mrb[0].mxu0
  %789 = vmatprep.mubr.f32.mxu0 0.0
  %790 = vmatmul.mubr.f32.gmra.mrb[0].mxu0 %v644
  %v791 = vpop.f32.mrb[0].mxu0
  %v792 = vadd.f32 %v673, %v791
  %v793 = vpop.f32.mrb[0].mxu0
  %794 = vmatprep.mubr.f32.mxu0 0.0
  %795 = vmatmul.mubr.f32.gmra.mrb[0].mxu0 %v645
  %v796 = vpop.f32.mrb[0].mxu0
  %v797 = vadd.f32 %v673, %v796
  %v798 = vpop.f32.mrb[0].mxu0
  %799 = vmatprep.mubr.f32.mxu0 0.0
  %800 = vmatmul.mubr.f32.gmra.mrb[0].mxu0 %v646
  %v801 = vpop.f32.mrb[0].mxu0
  %v802 = vadd.f32 %v673, %v801
  %v803 = vpop.f32.mrb[0].mxu0
  %804 = vmatprep.mubr.f32.mxu0 0.0
  %805 = vmatmul.mubr.f32.gmra.mrb[0].mxu0 %v647
  %v806 = vpop.f32.mrb[0].mxu0
  %v807 = vadd.f32 %v673, %v806
  %v808 = vpop.f32.mrb[0].mxu0
  %809 = vmatprep.mubr.f32.mxu0 0.0
  %810 = vmatmul.mubr.f32.gmra.mrb[0].mxu0 %v648
  %v811 = vpop.f32.mrb[0].mxu0
  %v812 = vadd.f32 %v673, %v811
  %v813 = vpop.f32.mrb[0].mxu0
  %814 = vmatprep.mubr.f32.mxu0 0.0
  %815 = vmatmul.mubr.f32.gmra.mrb[0].mxu0 %v649
  %v816 = vpop.f32.mrb[0].mxu0
  %v817 = vadd.f32 %v673, %v816
  %v818 = vpop.f32.mrb[0].mxu0
  %819 = vmatprep.mubr.f32.mxu0 0.0
  %820 = vmatmul.mubr.f32.gmra.mrb[0].mxu0 %v650
  %v821 = vpop.f32.mrb[0].mxu0
  %v822 = vadd.f32 %v673, %v821
  %v823 = vpop.f32.mrb[0].mxu0
  %824 = vmatprep.mubr.f32.mxu0 0.0
  %825 = vmatmul.mubr.f32.gmra.mrb[0].mxu0 %v651
  %v826 = vpop.f32.mrb[0].mxu0
  %v827 = vadd.f32 %v673, %v826
  %v828 = vpop.f32.mrb[0].mxu0
  %829 = vdwg.mxu0
  %v830 = vlaneseq
  %v831 = vand.u32 %v830, 127
  %vm832 = vcmp.lt.s32.totalorder %v831, 2
  %v833 = vsel %vm832, %v742, -1e+30
  %v834 = vsel %vm832, %v747, -1e+30
  %v835 = vsel %vm832, %v752, -1e+30
  %v836 = vsel %vm832, %v757, -1e+30
  %v837 = vsel %vm832, %v762, -1e+30
  %v838 = vsel %vm832, %v767, -1e+30
  %v839 = vsel %vm832, %v772, -1e+30
  %v840 = vsel %vm832, %v777, -1e+30
  %v841 = vsel %vm832, %v782, -1e+30
  %v842 = vsel %vm832, %v787, -1e+30
  %v843 = vsel %vm832, %v792, -1e+30
  %v844 = vsel %vm832, %v797, -1e+30
  %v845 = vsel %vm832, %v802, -1e+30
  %v846 = vsel %vm832, %v807, -1e+30
  %v847 = vsel %vm832, %v812, -1e+30
  %v848 = vsel %vm832, %v817, -1e+30
  %v849 = vsel %vm832, %v822, -1e+30
  %v850 = vsel %vm832, %v827, -1e+30
  %851 = vmax.xlane.f32.xlu0 %v833
  %v852 = vpop.xlane.xlu0 %851
  %853 = vmax.xlane.f32.xlu0 %v834
  %v854 = vpop.xlane.xlu0 %853
  %855 = vmax.xlane.f32.xlu0 %v835
  %v856 = vpop.xlane.xlu0 %855
  %857 = vmax.xlane.f32.xlu0 %v836
  %v858 = vpop.xlane.xlu0 %857
  %859 = vmax.xlane.f32.xlu0 %v837
  %v860 = vpop.xlane.xlu0 %859
  %861 = vmax.xlane.f32.xlu0 %v838
  %v862 = vpop.xlane.xlu0 %861
  %863 = vmax.xlane.f32.xlu0 %v839
  %v864 = vpop.xlane.xlu0 %863
  %865 = vmax.xlane.f32.xlu0 %v840
  %v866 = vpop.xlane.xlu0 %865
  %867 = vmax.xlane.f32.xlu0 %v841
  %v868 = vpop.xlane.xlu0 %867
  %869 = vmax.xlane.f32.xlu0 %v842
  %v870 = vpop.xlane.xlu0 %869
  %871 = vmax.xlane.f32.xlu0 %v843
  %v872 = vpop.xlane.xlu0 %871
  %873 = vmax.xlane.f32.xlu0 %v844
  %v874 = vpop.xlane.xlu0 %873
  %875 = vmax.xlane.f32.xlu0 %v845
  %v876 = vpop.xlane.xlu0 %875
  %877 = vmax.xlane.f32.xlu0 %v846
  %v878 = vpop.xlane.xlu0 %877
  %879 = vmax.xlane.f32.xlu0 %v847
  %v880 = vpop.xlane.xlu0 %879
  %881 = vmax.xlane.f32.xlu0 %v848
  %v882 = vpop.xlane.xlu0 %881
  %883 = vmax.xlane.f32.xlu0 %v849
  %v884 = vpop.xlane.xlu0 %883
  %885 = vmax.xlane.f32.xlu0 %v850
  %v886 = vpop.xlane.xlu0 %885
  %v887 = vsub.f32 %v833, %v852
  %v888 = vsub.f32 %v834, %v854
  %v889 = vsub.f32 %v835, %v856
  %v890 = vsub.f32 %v836, %v858
  %v891 = vsub.f32 %v837, %v860
  %v892 = vsub.f32 %v838, %v862
  %v893 = vsub.f32 %v839, %v864
  %v894 = vsub.f32 %v840, %v866
  %v895 = vsub.f32 %v841, %v868
  %v896 = vsub.f32 %v842, %v870
  %v897 = vsub.f32 %v843, %v872
  %v898 = vsub.f32 %v844, %v874
  %v899 = vsub.f32 %v845, %v876
  %v900 = vsub.f32 %v846, %v878
  %v901 = vsub.f32 %v847, %v880
  %v902 = vsub.f32 %v848, %v882
  %v903 = vsub.f32 %v849, %v884
  %v904 = vsub.f32 %v850, %v886
  %v905 = vmul.f32 %v887, 1.442695
  %v906 = vpow.pop %v905
  %v907 = vmul.f32 %v888, 1.442695
  %v908 = vpow.pop %v907
  %v909 = vmul.f32 %v889, 1.442695
  %v910 = vpow.pop %v909
  %v911 = vmul.f32 %v890, 1.442695
  %v912 = vpow.pop %v911
  %v913 = vmul.f32 %v891, 1.442695
  %v914 = vpow.pop %v913
  %v915 = vmul.f32 %v892, 1.442695
  %v916 = vpow.pop %v915
  %v917 = vmul.f32 %v893, 1.442695
  %v918 = vpow.pop %v917
  %v919 = vmul.f32 %v894, 1.442695
  %v920 = vpow.pop %v919
  %v921 = vmul.f32 %v895, 1.442695
  %v922 = vpow.pop %v921
  %v923 = vmul.f32 %v896, 1.442695
  %v924 = vpow.pop %v923
  %v925 = vmul.f32 %v897, 1.442695
  %v926 = vpow.pop %v925
  %v927 = vmul.f32 %v898, 1.442695
  %v928 = vpow.pop %v927
  %v929 = vmul.f32 %v899, 1.442695
  %v930 = vpow.pop %v929
  %v931 = vmul.f32 %v900, 1.442695
  %v932 = vpow.pop %v931
  %v933 = vmul.f32 %v901, 1.442695
  %v934 = vpow.pop %v933
  %v935 = vmul.f32 %v902, 1.442695
  %v936 = vpow.pop %v935
  %v937 = vmul.f32 %v903, 1.442695
  %v938 = vpow.pop %v937
  %v939 = vmul.f32 %v904, 1.442695
  %v940 = vpow.pop %v939
  %941 = vadd.xlane.f32.xlu0 %v906
  %v942 = vpop.xlane.xlu0 %941
  %943 = vadd.xlane.f32.xlu0 %v908
  %v944 = vpop.xlane.xlu0 %943
  %945 = vadd.xlane.f32.xlu0 %v910
  %v946 = vpop.xlane.xlu0 %945
  %947 = vadd.xlane.f32.xlu0 %v912
  %v948 = vpop.xlane.xlu0 %947
  %949 = vadd.xlane.f32.xlu0 %v914
  %v950 = vpop.xlane.xlu0 %949
  %951 = vadd.xlane.f32.xlu0 %v916
  %v952 = vpop.xlane.xlu0 %951
  %953 = vadd.xlane.f32.xlu0 %v918
  %v954 = vpop.xlane.xlu0 %953
  %955 = vadd.xlane.f32.xlu0 %v920
  %v956 = vpop.xlane.xlu0 %955
  %957 = vadd.xlane.f32.xlu0 %v922
  %v958 = vpop.xlane.xlu0 %957
  %959 = vadd.xlane.f32.xlu0 %v924
  %v960 = vpop.xlane.xlu0 %959
  %961 = vadd.xlane.f32.xlu0 %v926
  %v962 = vpop.xlane.xlu0 %961
  %963 = vadd.xlane.f32.xlu0 %v928
  %v964 = vpop.xlane.xlu0 %963
  %965 = vadd.xlane.f32.xlu0 %v930
  %v966 = vpop.xlane.xlu0 %965
  %967 = vadd.xlane.f32.xlu0 %v932
  %v968 = vpop.xlane.xlu0 %967
  %969 = vadd.xlane.f32.xlu0 %v934
  %v970 = vpop.xlane.xlu0 %969
  %971 = vadd.xlane.f32.xlu0 %v936
  %v972 = vpop.xlane.xlu0 %971
  %973 = vadd.xlane.f32.xlu0 %v938
  %v974 = vpop.xlane.xlu0 %973
  %975 = vadd.xlane.f32.xlu0 %v940
  %v976 = vpop.xlane.xlu0 %975
  %v977 = vlog2.pop %v942
  %v978 = vmul.f32 %v977, 0.6931472
  %v979 = vlog2.pop %v944
  %v980 = vmul.f32 %v979, 0.6931472
  %v981 = vlog2.pop %v946
  %v982 = vmul.f32 %v981, 0.6931472
  %v983 = vlog2.pop %v948
  %v984 = vmul.f32 %v983, 0.6931472
  %v985 = vlog2.pop %v950
  %v986 = vmul.f32 %v985, 0.6931472
  %v987 = vlog2.pop %v952
  %v988 = vmul.f32 %v987, 0.6931472
  %v989 = vlog2.pop %v954
  %v990 = vmul.f32 %v989, 0.6931472
  %v991 = vlog2.pop %v956
  %v992 = vmul.f32 %v991, 0.6931472
  %v993 = vlog2.pop %v958
  %v994 = vmul.f32 %v993, 0.6931472
  %v995 = vlog2.pop %v960
  %v996 = vmul.f32 %v995, 0.6931472
  %v997 = vlog2.pop %v962
  %v998 = vmul.f32 %v997, 0.6931472
  %v999 = vlog2.pop %v964
  %v1000 = vmul.f32 %v999, 0.6931472
  %v1001 = vlog2.pop %v966
  %v1002 = vmul.f32 %v1001, 0.6931472
  %v1003 = vlog2.pop %v968
  %v1004 = vmul.f32 %v1003, 0.6931472
  %v1005 = vlog2.pop %v970
  %v1006 = vmul.f32 %v1005, 0.6931472
  %v1007 = vlog2.pop %v972
  %v1008 = vmul.f32 %v1007, 0.6931472
  %v1009 = vlog2.pop %v974
  %v1010 = vmul.f32 %v1009, 0.6931472
  %v1011 = vlog2.pop %v976
  %v1012 = vmul.f32 %v1011, 0.6931472
  %v1013 = vsub.f32 %v887, %v978
  %v1014 = vsub.f32 %v888, %v980
  %v1015 = vsub.f32 %v889, %v982
  %v1016 = vsub.f32 %v890, %v984
  %v1017 = vsub.f32 %v891, %v986
  %v1018 = vsub.f32 %v892, %v988
  %v1019 = vsub.f32 %v893, %v990
  %v1020 = vsub.f32 %v894, %v992
  %v1021 = vsub.f32 %v895, %v994
  %v1022 = vsub.f32 %v896, %v996
  %v1023 = vsub.f32 %v897, %v998
  %v1024 = vsub.f32 %v898, %v1000
  %v1025 = vsub.f32 %v899, %v1002
  %v1026 = vsub.f32 %v900, %v1004
  %v1027 = vsub.f32 %v901, %v1006
  %v1028 = vsub.f32 %v902, %v1008
  %v1029 = vsub.f32 %v903, %v1010
  %v1030 = vsub.f32 %v904, %v1012
  %vm1031 = vcmask 15360
  %1032 = vst.msk [vmem:[%s7] sm:$0xff] %vm1031, %v1013
  %1033 = vst.msk [vmem:[%s7 + $0x8] sm:$0xff] %vm1031, %v1014
  %1034 = vst.msk [vmem:[%s7 + $0x10] sm:$0xff] %vm1031, %v1015
  %1035 = vst.msk [vmem:[%s7 + $0x18] sm:$0xff] %vm1031, %v1016
  %1036 = vst.msk [vmem:[%s7 + $0x20] sm:$0xff] %vm1031, %v1017
  %1037 = vst.msk [vmem:[%s7 + $0x28] sm:$0xff] %vm1031, %v1018
  %1038 = vst.msk [vmem:[%s7 + $0x30] sm:$0xff] %vm1031, %v1019
  %1039 = vst.msk [vmem:[%s7 + $0x38] sm:$0xff] %vm1031, %v1020
  %1040 = vst.msk [vmem:[%s7 + $0x40] sm:$0xff] %vm1031, %v1021
  %1041 = vst.msk [vmem:[%s7 + $0x48] sm:$0xff] %vm1031, %v1022
  %1042 = vst.msk [vmem:[%s7 + $0x50] sm:$0xff] %vm1031, %v1023
  %1043 = vst.msk [vmem:[%s7 + $0x58] sm:$0xff] %vm1031, %v1024
  %1044 = vst.msk [vmem:[%s7 + $0x60] sm:$0xff] %vm1031, %v1025
  %1045 = vst.msk [vmem:[%s7 + $0x68] sm:$0xff] %vm1031, %v1026
  %1046 = vst.msk [vmem:[%s7 + $0x70] sm:$0xff] %vm1031, %v1027
  %1047 = vst.msk [vmem:[%s7 + $0x78] sm:$0xff] %vm1031, %v1028
  %1048 = vst.msk [vmem:[%s7 + $0x80] sm:$0xff] %vm1031, %v1029
  %1049 = vst.msk [vmem:[%s7 + $0x88] sm:$0xff] %vm1031, %v1030
  // Predicated region
  $region30: #{sampled_forward.1} parent=0 // pred_check
    _
  $region31: #{sampled_forward.1} parent=0 // pred_check_branch
    %1051 = sbr.rel (0) target = $region33
  $region32: #{sampled_forward.1} parent=0 // pred_region
    _
  $region33: #{sampled_forward.1} parent=0 // pred_fallthru
    _
  // Predicated region
  $region34: #{sampled_forward.1} parent=0 // pred_check
    _
  $region35: #{sampled_forward.1} parent=0 // pred_check_branch
    %1053 = sbr.rel (0) target = $region37
  $region36: #{sampled_forward.1} parent=0 // pred_region
    _
  $region37: #{sampled_forward.1} parent=0 // pred_fallthru
    _

</llo_original>
